<compile_context>
chip_gen: v5e
topology: v5e:2x2
jax: 0.10.0
libtpu: 0.0.40
codegen_flags: <defaults>
</compile_context>

<pallas_src>
import math
import jax
import jax.numpy as jnp
import numpy as np
from jax.experimental import pallas as pl
from jax.experimental.pallas import tpu as pltpu

P = 128  # lane-padded width for every layer (mu block | sigma block | ... | ones lane)


# ----------------------------- Pallas kernel ------------------------------

def _fused_mlp_kernel(x_ref, w_ref, out_ref):
    """Fused forward for both DeepNets (mu + sigma) in one matmul chain.

    x_ref  : (B, P)     packed [src1 | src2 | zeros | 1.0] activations
    w_ref  : (4, P, P)  block-diagonal weights, biases folded into row P-1
    out_ref: (B, 2)     [mu, pre_log_sigma]
    """
    h = x_ref[...]
    # fc1 -> relu (dropout = identity in eval)
    h = jnp.maximum(jnp.dot(h, w_ref[0], preferred_element_type=jnp.float32), 0.0)
    # fc2 -> relu
    h = jnp.maximum(jnp.dot(h, w_ref[1], preferred_element_type=jnp.float32), 0.0)
    # fc3 -> relu
    h = jnp.maximum(jnp.dot(h, w_ref[2], preferred_element_type=jnp.float32), 0.0)
    # fc4 (no activation); columns 0/1 are mu / pre_log_sigma
    h = jnp.dot(h, w_ref[3], preferred_element_type=jnp.float32)
    out_ref[...] = h[:, :2]


# ------------------------------ JAX wrapper -------------------------------

def pack_inputs(src1, src2, p=P):
    """Host-side packing: [src1 | src2 | zeros | 1.0] -> (B, p)."""
    B, d = src1.shape
    pad = jnp.zeros((B, p - 2 * d - 1), src1.dtype)
    one = jnp.ones((B, 1), src1.dtype)
    return jnp.concatenate([src1, src2, pad, one], axis=1)


def lognormal_mnist_helper(src1, src2, w_packed):
    """src1, src2: (B, D_in) float32. w_packed: (4, P, P). Returns (B, 2)."""
    x = pack_inputs(src1, src2, w_packed.shape[-1])
    B = x.shape[0]
    vmem = pl.BlockSpec(memory_space=pltpu.MemorySpace.VMEM)
    return pl.pallas_call(
        _fused_mlp_kernel,
        out_shape=jax.ShapeDtypeStruct((B, 2), jnp.float32),
        in_specs=[vmem, vmem],
        out_specs=vmem,
    )(x, w_packed)
    # TODO(synk): for production batch sizes, add a batch grid with a
    # constant-index weight BlockSpec and dimension_semantics=("parallel",).


# ------------------------- parameter construction -------------------------

def init_deepnet_params(key, d_in, hs, d_out):
    """nn.Linear-style init (uniform +-1/sqrt(fan_in)); weights stored (in, out)."""
    dims = [d_in, hs[0], hs[1], hs[2], d_out]
    params = []
    for i in range(4):
        key, kw, kb = jax.random.split(key, 3)
        fan_in, fan_out = dims[i], dims[i + 1]
        bound = 1.0 / math.sqrt(fan_in)
        w = jax.random.uniform(kw, (fan_in, fan_out), jnp.float32, -bound, bound)
        b = jax.random.uniform(kb, (1, fan_out), jnp.float32, -bound, bound)
        params += [w, b]
    return params


def pack_block_diag_params(mu_params, sigma_params, d_in, hs, d_out, p=P):
    """Pack both nets into one (4, p, p) block-diagonal weight stack.

    Layer l: mu weights at [0:n_in, 0:n_out], sigma at [n_in:2n_in, n_out:2n_out],
    biases folded into row p-1; W[p-1, p-1] = 1 propagates the ones lane
    through the ReLU layers.  Final layer: mu -> column 0, sigma -> column 1.
    """
    dims = [d_in, hs[0], hs[1], hs[2], d_out]
    one_idx = p - 1
    ws = []
    for l in range(4):
        n_in, n_out = dims[l], dims[l + 1]
        mw, mb = mu_params[2 * l], mu_params[2 * l + 1]
        sw, sb = sigma_params[2 * l], sigma_params[2 * l + 1]
        W = jnp.zeros((p, p), jnp.float32)
        W = W.at[:n_in, :n_out].set(mw)
        W = W.at[n_in:2 * n_in, n_out:2 * n_out].set(sw)
        W = W.at[one_idx, :n_out].set(mb.reshape(-1))
        W = W.at[one_idx, n_out:2 * n_out].set(sb.reshape(-1))
        if l < 3:
            W = W.at[one_idx, one_idx].set(1.0)  # keep ones lane alive (ReLU(1)=1)
        ws.append(W)
    return jnp.stack(ws, axis=0)  # (4, p, p)


# ------------------------------ reference ---------------------------------

def _deepnet_ref(x, prm):
    w1, b1, w2, b2, w3, b3, w4, b4 = prm
    h = jnp.maximum(x @ w1 + b1, 0.0)
    h = jnp.maximum(h @ w2 + b2, 0.0)
    h = jnp.maximum(h @ w3 + b3, 0.0)
    return h @ w4 + b4


def reference(src1, src2, mu_p, sigma_p):
    mu = _deepnet_ref(src1, mu_p).reshape(-1, 1)
    pls = _deepnet_ref(src2, sigma_p).reshape(-1, 1)
    return jnp.concatenate([mu, pls], axis=1)


# --------------------------------- main ------------------------------------

if __name__ == "__main__":
    # Small shapes consistent with the module: MLP on flattened inputs.
    B, D_in, D_out = 8, 32, 1
    hidden_sizes = (32, 32, 32)
    dropout_rate = 0.0  # inference-mode identity

    key = jax.random.PRNGKey(0)
    k_src1, k_src2, k_mu, k_sigma = jax.random.split(key, 4)

    src1 = jax.random.normal(k_src1, (B, D_in), jnp.float32)
    src2 = jax.random.normal(k_src2, (B, D_in), jnp.float32)

    mu_params = init_deepnet_params(k_mu, D_in, hidden_sizes, D_out)
    sigma_params = init_deepnet_params(k_sigma, D_in, hidden_sizes, D_out)

    # One-time host-side packing of all 16 parameter arrays into a single tensor.
    w_packed = pack_block_diag_params(mu_params, sigma_params,
                                      D_in, hidden_sizes, D_out)

    out = lognormal_mnist_helper(src1, src2, w_packed)
    out = jax.block_until_ready(out)

    ref = reference(src1, src2, mu_params, sigma_params)
    np.testing.assert_allclose(np.asarray(out), np.asarray(ref),
                               rtol=1e-5, atol=1e-5)
    assert out.shape == (B, 2)

    print("KERNEL_OK")
</pallas_src>

<mosaic_0001>
module attributes {stable_mosaic.version = 11 : i64} {
  func.func @_fused_mlp_kernel(%arg0: memref<8x128xf32, #tpu.memory_space<vmem>>, %arg1: memref<4x128x128xf32, #tpu.memory_space<vmem>>, %arg2: memref<8x2xf32, #tpu.memory_space<vmem>>) attributes {dimension_semantics = [], scalar_prefetch = 0 : i64, scratch_operands = 0 : i64, tpu.core_type = #tpu.core_type<tc>} {
    %c0 = arith.constant 0 : index
    %c0_0 = arith.constant 0 : index
    %0 = vector.load %arg0[%c0, %c0_0] : memref<8x128xf32, #tpu.memory_space<vmem>>, vector<8x128xf32>
    %c0_1 = arith.constant 0 : index
    %c0_2 = arith.constant 0 : index
    %c0_3 = arith.constant 0 : index
    %1 = vector.load %arg1[%c0_1, %c0_2, %c0_3] : memref<4x128x128xf32, #tpu.memory_space<vmem>>, vector<1x128x128xf32>
    %2 = vector.shape_cast %1 : vector<1x128x128xf32> to vector<128x128xf32>
    %cst = arith.constant dense<0.000000e+00> : vector<8x128xf32>
    %3 = tpu.matmul %0, %2, %cst {dimension_numbers = #tpu.dot_dimension_numbers<[1], [0], [0], [1], [0, 0, 1, 1], [], []>} : vector<8x128xf32>, vector<128x128xf32>, vector<8x128xf32> -> vector<8x128xf32>
    %cst_4 = arith.constant 0.000000e+00 : f32
    %4 = vector.broadcast %cst_4 : f32 to vector<8x128xf32>
    %5 = arith.maximumf %3, %4 : vector<8x128xf32>
    %c1 = arith.constant 1 : index
    %c0_5 = arith.constant 0 : index
    %c0_6 = arith.constant 0 : index
    %6 = vector.load %arg1[%c1, %c0_5, %c0_6] : memref<4x128x128xf32, #tpu.memory_space<vmem>>, vector<1x128x128xf32>
    %7 = vector.shape_cast %6 : vector<1x128x128xf32> to vector<128x128xf32>
    %cst_7 = arith.constant dense<0.000000e+00> : vector<8x128xf32>
    %8 = tpu.matmul %5, %7, %cst_7 {dimension_numbers = #tpu.dot_dimension_numbers<[1], [0], [0], [1], [0, 0, 1, 1], [], []>} : vector<8x128xf32>, vector<128x128xf32>, vector<8x128xf32> -> vector<8x128xf32>
    %cst_8 = arith.constant 0.000000e+00 : f32
    %9 = vector.broadcast %cst_8 : f32 to vector<8x128xf32>
    %10 = arith.maximumf %8, %9 : vector<8x128xf32>
    %c2 = arith.constant 2 : index
    %c0_9 = arith.constant 0 : index
    %c0_10 = arith.constant 0 : index
    %11 = vector.load %arg1[%c2, %c0_9, %c0_10] : memref<4x128x128xf32, #tpu.memory_space<vmem>>, vector<1x128x128xf32>
    %12 = vector.shape_cast %11 : vector<1x128x128xf32> to vector<128x128xf32>
    %cst_11 = arith.constant dense<0.000000e+00> : vector<8x128xf32>
    %13 = tpu.matmul %10, %12, %cst_11 {dimension_numbers = #tpu.dot_dimension_numbers<[1], [0], [0], [1], [0, 0, 1, 1], [], []>} : vector<8x128xf32>, vector<128x128xf32>, vector<8x128xf32> -> vector<8x128xf32>
    %cst_12 = arith.constant 0.000000e+00 : f32
    %14 = vector.broadcast %cst_12 : f32 to vector<8x128xf32>
    %15 = arith.maximumf %13, %14 : vector<8x128xf32>
    %c3 = arith.constant 3 : index
    %c0_13 = arith.constant 0 : index
    %c0_14 = arith.constant 0 : index
    %16 = vector.load %arg1[%c3, %c0_13, %c0_14] : memref<4x128x128xf32, #tpu.memory_space<vmem>>, vector<1x128x128xf32>
    %17 = vector.shape_cast %16 : vector<1x128x128xf32> to vector<128x128xf32>
    %cst_15 = arith.constant dense<0.000000e+00> : vector<8x128xf32>
    %18 = tpu.matmul %15, %17, %cst_15 {dimension_numbers = #tpu.dot_dimension_numbers<[1], [0], [0], [1], [0, 0, 1, 1], [], []>} : vector<8x128xf32>, vector<128x128xf32>, vector<8x128xf32> -> vector<8x128xf32>
    %19 = vector.extract_strided_slice %18 {offsets = [0, 0], sizes = [8, 2], strides = [1, 1]} : vector<8x128xf32> to vector<8x2xf32>
    %c0_16 = arith.constant 0 : index
    %c0_17 = arith.constant 0 : index
    %20 = vector.load %arg2[%c0_16, %c0_17] : memref<8x2xf32, #tpu.memory_space<vmem>>, vector<8x2xf32>
    tpu.vector_store %arg2[%c0_16, %c0_17], %19 {strides = array<i32>} : memref<8x2xf32, #tpu.memory_space<vmem>>, vector<8x2xf32>,
    return
  }
}

</mosaic_0001>

<llo_original>
// kernel: tpu_custom_call.1
$region0: #{tpu_custom_call.1}
  #allocation0 [shape = 'u32[]', space=smem, size = 0x4, offset = 0x4, fixed_abs, tag = 'smem constant byte address 0x4 - core index']
  #allocation1 [shape = 'u32[72,128]{1,0:T(1,128)}', space=vmem, size = 0x9000, scoped, tag = 'internal scratch']
  %s0 = inlined_call_operand.hbm [shape: f32[8,128], index: 0, kind: input, shape index: {}]
  %s1 = inlined_call_operand.hbm [shape: f32[4,128,128], index: 1, kind: input, shape index: {}]
  %s2 = inlined_call_operand.vmem [shape: f32[8,2], index: 2, kind: output, shape index: {}]
  %s3 = sld [smem:[#allocation0]]
  $region26: #{tpu_custom_call.1} parent=0
    _
  %s5 = ssub.s32 1, %s3
  %s6 = scalar_select 0, %s5, %s3
  $region1: #{tpu_custom_call.1} parent=0
    #allocation2 [shape = 'u8[4096]{0}', space=vmem, size = 0x1000, scoped, tag = 'input window, operand 0, single buffered']
    #allocation3 [shape = 's32[1]{0}', space=sflag, size = 0x4, scoped, tag = 'scoped memory for tpu_custom_call.1']
    #allocation4 [shape = 'u8[262144]{0}', space=vmem, size = 0x40000, scoped, tag = 'input window, operand 1, single buffered']
    #allocation5 [shape = 's32[1]{0}', space=sflag, size = 0x4, scoped, tag = 'scoped memory for tpu_custom_call.1']
    %7 = vsyncpa [#allocation3], 0
    %8 = vsyncpa [#allocation5], 0
    // Predicated region
    $region2: #{tpu_custom_call.1} parent=1 // pred_check
      _
    $region3: #{tpu_custom_call.1} parent=1 // pred_check_branch
      %10 = sbr.rel (0) target = $region5
    $region4: #{tpu_custom_call.1} parent=1 // pred_region
      %12 = vsyncadd [#allocation3], 0
      %s14 = sshll.u32 %s0, 4
      %s15 = int_to_ptr.hbm [resolvable:$true] %s14
      %s16 = sshll.u32 [#allocation2], 4
      %s17 = int_to_ptr.vmem [resolvable:$true] %s16
      %19 = dma.hbm_to_vmem [thread:$0]  %s15, 128, %s17, [#allocation3]
    $region5: #{tpu_custom_call.1} parent=1 // pred_fallthru
      _
    // Predicated region
    $region6: #{tpu_custom_call.1} parent=1 // pred_check
      _
    $region7: #{tpu_custom_call.1} parent=1 // pred_check_branch
      %21 = sbr.rel (0) target = $region9
    $region8: #{tpu_custom_call.1} parent=1 // pred_region
      %23 = vsyncadd [#allocation5], 0
      %s24 = sshll.u32 %s1, 4
      %s25 = int_to_ptr.hbm [resolvable:$true] %s24
      %s26 = sshll.u32 [#allocation4], 4
      %s27 = int_to_ptr.vmem [resolvable:$true] %s26
      %32 = dma.hbm_to_vmem [thread:$0]  %s25, 8192, %s27, [#allocation5], 128, 128, 8
    $region9: #{tpu_custom_call.1} parent=1 // pred_fallthru
      _
    // Predicated region
    $region10: #{tpu_custom_call.1} parent=1 // pred_check
      _
    $region11: #{tpu_custom_call.1} parent=1 // pred_check_branch
      %34 = sbr.rel (0) target = $region13
    $region12: #{tpu_custom_call.1} parent=1 // pred_region
      %36 = dma.done [#allocation3], 128
    $region13: #{tpu_custom_call.1} parent=1 // pred_fallthru
      _
    // Predicated region
    $region14: #{tpu_custom_call.1} parent=1 // pred_check
      _
    $region15: #{tpu_custom_call.1} parent=1 // pred_check_branch
      %38 = sbr.rel (0) target = $region17
    $region16: #{tpu_custom_call.1} parent=1 // pred_region
      %40 = dma.done [#allocation5], 8192
    $region17: #{tpu_custom_call.1} parent=1 // pred_fallthru
      _
    %v41 = vld [vmem:[#allocation2] sm:$0xff]
    %v42 = vld [vmem:[#allocation4] sm:$0xff]
    %v43 = vld [vmem:[#allocation4 + $0x8] sm:$0xff]
    %v44 = vld [vmem:[#allocation4 + $0x10] sm:$0xff]
    %v45 = vld [vmem:[#allocation4 + $0x18] sm:$0xff]
    %v46 = vld [vmem:[#allocation4 + $0x20] sm:$0xff]
    %v47 = vld [vmem:[#allocation4 + $0x28] sm:$0xff]
    %v48 = vld [vmem:[#allocation4 + $0x30] sm:$0xff]
    %v49 = vld [vmem:[#allocation4 + $0x38] sm:$0xff]
    %v50 = vld [vmem:[#allocation4 + $0x40] sm:$0xff]
    %v51 = vld [vmem:[#allocation4 + $0x48] sm:$0xff]
    %v52 = vld [vmem:[#allocation4 + $0x50] sm:$0xff]
    %v53 = vld [vmem:[#allocation4 + $0x58] sm:$0xff]
    %v54 = vld [vmem:[#allocation4 + $0x60] sm:$0xff]
    %v55 = vld [vmem:[#allocation4 + $0x68] sm:$0xff]
    %v56 = vld [vmem:[#allocation4 + $0x70] sm:$0xff]
    %v57 = vld [vmem:[#allocation4 + $0x78] sm:$0xff]
    %58 = vmatpush.msra.mxu0 %v57
    %59 = vmatpush.msra.mxu0 %v56
    %60 = vmatpush.msra.mxu0 %v55
    %61 = vmatpush.msra.mxu0 %v54
    %62 = vmatpush.msra.mxu0 %v53
    %63 = vmatpush.msra.mxu0 %v52
    %64 = vmatpush.msra.mxu0 %v51
    %65 = vmatpush.msra.mxu0 %v50
    %66 = vmatpush.msra.mxu0 %v49
    %67 = vmatpush.msra.mxu0 %v48
    %68 = vmatpush.msra.mxu0 %v47
    %69 = vmatpush.msra.mxu0 %v46
    %70 = vmatpush.msra.mxu0 %v45
    %71 = vmatpush.msra.mxu0 %v44
    %72 = vmatpush.msra.mxu0 %v43
    %73 = vmatpush.msra.mxu0 %v42
    %74 = vmatmul.f32.gmra.mxu0 %v41
    %v75 = vpop.f32.mrf.mxu0
    %v76 = vadd.f32 0.0, %v75
    %77 = vdwg.mxu0
    %v78 = vmax.f32 %v76, 0.0
    %s79 = scalar_lea.vmem [#allocation4], 128
    %v80 = vld [vmem:[%s79] sm:$0xff]
    %v81 = vld [vmem:[%s79 + $0x8] sm:$0xff]
    %v82 = vld [vmem:[%s79 + $0x10] sm:$0xff]
    %v83 = vld [vmem:[%s79 + $0x18] sm:$0xff]
    %v84 = vld [vmem:[%s79 + $0x20] sm:$0xff]
    %v85 = vld [vmem:[%s79 + $0x28] sm:$0xff]
    %v86 = vld [vmem:[%s79 + $0x30] sm:$0xff]
    %v87 = vld [vmem:[%s79 + $0x38] sm:$0xff]
    %v88 = vld [vmem:[%s79 + $0x40] sm:$0xff]
    %v89 = vld [vmem:[%s79 + $0x48] sm:$0xff]
    %v90 = vld [vmem:[%s79 + $0x50] sm:$0xff]
    %v91 = vld [vmem:[%s79 + $0x58] sm:$0xff]
    %v92 = vld [vmem:[%s79 + $0x60] sm:$0xff]
    %v93 = vld [vmem:[%s79 + $0x68] sm:$0xff]
    %v94 = vld [vmem:[%s79 + $0x70] sm:$0xff]
    %v95 = vld [vmem:[%s79 + $0x78] sm:$0xff]
    %96 = vmatpush.msra.mxu0 %v95
    %97 = vmatpush.msra.mxu0 %v94
    %98 = vmatpush.msra.mxu0 %v93
    %99 = vmatpush.msra.mxu0 %v92
    %100 = vmatpush.msra.mxu0 %v91
    %101 = vmatpush.msra.mxu0 %v90
    %102 = vmatpush.msra.mxu0 %v89
    %103 = vmatpush.msra.mxu0 %v88
    %104 = vmatpush.msra.mxu0 %v87
    %105 = vmatpush.msra.mxu0 %v86
    %106 = vmatpush.msra.mxu0 %v85
    %107 = vmatpush.msra.mxu0 %v84
    %108 = vmatpush.msra.mxu0 %v83
    %109 = vmatpush.msra.mxu0 %v82
    %110 = vmatpush.msra.mxu0 %v81
    %111 = vmatpush.msra.mxu0 %v80
    %112 = vmatmul.f32.gmra.mxu0 %v78
    %v113 = vpop.f32.mrf.mxu0
    %v114 = vadd.f32 0.0, %v113
    %115 = vdwg.mxu0
    %v116 = vmax.f32 %v114, 0.0
    %s117 = scalar_lea.vmem [#allocation4], 256
    %v118 = vld [vmem:[%s117] sm:$0xff]
    %v119 = vld [vmem:[%s117 + $0x8] sm:$0xff]
    %v120 = vld [vmem:[%s117 + $0x10] sm:$0xff]
    %v121 = vld [vmem:[%s117 + $0x18] sm:$0xff]
    %v122 = vld [vmem:[%s117 + $0x20] sm:$0xff]
    %v123 = vld [vmem:[%s117 + $0x28] sm:$0xff]
    %v124 = vld [vmem:[%s117 + $0x30] sm:$0xff]
    %v125 = vld [vmem:[%s117 + $0x38] sm:$0xff]
    %v126 = vld [vmem:[%s117 + $0x40] sm:$0xff]
    %v127 = vld [vmem:[%s117 + $0x48] sm:$0xff]
    %v128 = vld [vmem:[%s117 + $0x50] sm:$0xff]
    %v129 = vld [vmem:[%s117 + $0x58] sm:$0xff]
    %v130 = vld [vmem:[%s117 + $0x60] sm:$0xff]
    %v131 = vld [vmem:[%s117 + $0x68] sm:$0xff]
    %v132 = vld [vmem:[%s117 + $0x70] sm:$0xff]
    %v133 = vld [vmem:[%s117 + $0x78] sm:$0xff]
    %134 = vmatpush.msra.mxu0 %v133
    %135 = vmatpush.msra.mxu0 %v132
    %136 = vmatpush.msra.mxu0 %v131
    %137 = vmatpush.msra.mxu0 %v130
    %138 = vmatpush.msra.mxu0 %v129
    %139 = vmatpush.msra.mxu0 %v128
    %140 = vmatpush.msra.mxu0 %v127
    %141 = vmatpush.msra.mxu0 %v126
    %142 = vmatpush.msra.mxu0 %v125
    %143 = vmatpush.msra.mxu0 %v124
    %144 = vmatpush.msra.mxu0 %v123
    %145 = vmatpush.msra.mxu0 %v122
    %146 = vmatpush.msra.mxu0 %v121
    %147 = vmatpush.msra.mxu0 %v120
    %148 = vmatpush.msra.mxu0 %v119
    %149 = vmatpush.msra.mxu0 %v118
    %150 = vmatmul.f32.gmra.mxu0 %v116
    %v151 = vpop.f32.mrf.mxu0
    %v152 = vadd.f32 0.0, %v151
    %153 = vdwg.mxu0
    %v154 = vmax.f32 %v152, 0.0
    %s155 = scalar_lea.vmem [#allocation4], 384
    %v156 = vld [vmem:[%s155] sm:$0xff]
    %v157 = vld [vmem:[%s155 + $0x8] sm:$0xff]
    %v158 = vld [vmem:[%s155 + $0x10] sm:$0xff]
    %v159 = vld [vmem:[%s155 + $0x18] sm:$0xff]
    %v160 = vld [vmem:[%s155 + $0x20] sm:$0xff]
    %v161 = vld [vmem:[%s155 + $0x28] sm:$0xff]
    %v162 = vld [vmem:[%s155 + $0x30] sm:$0xff]
    %v163 = vld [vmem:[%s155 + $0x38] sm:$0xff]
    %v164 = vld [vmem:[%s155 + $0x40] sm:$0xff]
    %v165 = vld [vmem:[%s155 + $0x48] sm:$0xff]
    %v166 = vld [vmem:[%s155 + $0x50] sm:$0xff]
    %v167 = vld [vmem:[%s155 + $0x58] sm:$0xff]
    %v168 = vld [vmem:[%s155 + $0x60] sm:$0xff]
    %v169 = vld [vmem:[%s155 + $0x68] sm:$0xff]
    %v170 = vld [vmem:[%s155 + $0x70] sm:$0xff]
    %v171 = vld [vmem:[%s155 + $0x78] sm:$0xff]
    %172 = vmatpush.msra.mxu0 %v171
    %173 = vmatpush.msra.mxu0 %v170
    %174 = vmatpush.msra.mxu0 %v169
    %175 = vmatpush.msra.mxu0 %v168
    %176 = vmatpush.msra.mxu0 %v167
    %177 = vmatpush.msra.mxu0 %v166
    %178 = vmatpush.msra.mxu0 %v165
    %179 = vmatpush.msra.mxu0 %v164
    %180 = vmatpush.msra.mxu0 %v163
    %181 = vmatpush.msra.mxu0 %v162
    %182 = vmatpush.msra.mxu0 %v161
    %183 = vmatpush.msra.mxu0 %v160
    %184 = vmatpush.msra.mxu0 %v159
    %185 = vmatpush.msra.mxu0 %v158
    %186 = vmatpush.msra.mxu0 %v157
    %187 = vmatpush.msra.mxu0 %v156
    %188 = vmatmul.f32.gmra.mxu0 %v154
    %v189 = vpop.f32.mrf.mxu0
    %v190 = vadd.f32 0.0, %v189
    %191 = vdwg.mxu0
    %vm192 = vcmask 15360
    %193 = vst.msk [vmem:[%s2] sm:$0xff] %vm192, %v190
    // Predicated region
    $region18: #{tpu_custom_call.1} parent=1 // pred_check
      _
    $region19: #{tpu_custom_call.1} parent=1 // pred_check_branch
      %195 = sbr.rel (0) target = $region21
    $region20: #{tpu_custom_call.1} parent=1 // pred_region
      _
    $region21: #{tpu_custom_call.1} parent=1 // pred_fallthru
      _
    // Predicated region
    $region22: #{tpu_custom_call.1} parent=1 // pred_check
      _
    $region23: #{tpu_custom_call.1} parent=1 // pred_check_branch
      %197 = sbr.rel (0) target = $region25
    $region24: #{tpu_custom_call.1} parent=1 // pred_region
      _
    $region25: #{tpu_custom_call.1} parent=1 // pred_fallthru
      _
    %198 = vsyncpa [#allocation3], 1
    %199 = vsyncpa [#allocation5], 1

</llo_original>
